<compile_context>
chip_gen: v5e
topology: v5e:2x2
jax: 0.10.0
libtpu: 0.0.40
codegen_flags: <defaults>
</compile_context>

<pallas_src>
import functools

import jax
import jax.numpy as jnp
from jax import lax
from jax.experimental import pallas as pl
from jax.experimental.pallas import tpu as pltpu


def _mlp_kernel(x_ref, w1_ref, b1_ref, w2_ref, b2_ref, w3_ref, b3_ref, o_ref):
    # x_ref: (TILE_B, D_in). All matmuls accumulate in f32 on the MXU.
    x = x_ref[...]
    h1 = jnp.dot(x, w1_ref[...], preferred_element_type=jnp.float32) + b1_ref[...]
    h1 = jnp.maximum(h1, 0.0)                                         # (TILE_B, H)
    h2 = jnp.dot(h1.astype(w2_ref.dtype), w2_ref[...],
                 preferred_element_type=jnp.float32) + b2_ref[...]
    h2 = jnp.maximum(h2, 0.0)                                         # (TILE_B, H2)
    # fc3: contract H2 (dim 1 of both operands) -> (1, TILE_B), lane-dense,
    # with no h2.T relayout.
    out = lax.dot_general(
        w3_ref[...], h2.astype(w3_ref.dtype),
        dimension_numbers=(((1,), (1,)), ((), ())),
        preferred_element_type=jnp.float32)
    out = out + b3_ref[0, 0]                                          # SMEM scalar bias
    o_ref[...] = out.astype(o_ref.dtype)


def _choose_tile(b_pad128, max_tile=8192):
    """Pick TILE_B (multiple of 128): as large as possible, but keep >= 2 grid
    steps when the padded batch allows it so v7x's 2 TensorCores both get work."""
    if b_pad128 >= 256:
        half = max(128, ((b_pad128 // 2) // 128) * 128)
        return min(max_tile, half)
    return b_pad128


@functools.partial(jax.jit, static_argnames=("use_bf16",))
def simple_model_forward(x, params, *, use_bf16=False):
    """Forward pass of SimpleModel.

    x: (B, D_in) float32 or (B, S, D_in) float32 (last timestep used).
    params: w1 (D_in,H), b1 (1,H), w2 (H,H2), b2 (1,H2), w3 (1,H2), b3 (1,1).
    Returns (B, 1) float32.
    """
    if x.ndim == 3:
        # Only the last timestep is ever used -> slice to 2-D in the wrapper so
        # the kernel (and any padding) only ever touches B*D_in elements.
        x = x[:, -1, :]
    B, D_in = x.shape
    H = params["w1"].shape[1]
    H2 = params["w2"].shape[1]

    b_pad128 = pl.cdiv(B, 128) * 128
    tile_b = _choose_tile(b_pad128)
    n_tiles = pl.cdiv(b_pad128, tile_b)
    b_pad = n_tiles * tile_b
    if b_pad != B:
        # Tiny 2-D pad (B x D_in only), not the full 3-D tensor.
        x = jnp.pad(x, ((0, b_pad - B), (0, 0)))

    w1, w2, w3 = params["w1"], params["w2"], params["w3"]
    if use_bf16:
        # Optional: halves x / weight DMA bytes (useful on v5e); biases and
        # accumulation stay f32.
        x = x.astype(jnp.bfloat16)
        w1 = w1.astype(jnp.bfloat16)
        w2 = w2.astype(jnp.bfloat16)
        w3 = w3.astype(jnp.bfloat16)

    out = pl.pallas_call(
        _mlp_kernel,
        out_shape=jax.ShapeDtypeStruct((1, b_pad), jnp.float32),
        grid=(n_tiles,),
        in_specs=[
            # Activations stream through VMEM in (TILE_B, D_in) blocks.
            pl.BlockSpec((tile_b, D_in), lambda i: (i, 0)),
            # Weights/biases: constant index_maps -> fetched once, stay resident.
            pl.BlockSpec((D_in, H), lambda i: (0, 0)),
            pl.BlockSpec((1, H), lambda i: (0, 0)),
            pl.BlockSpec((H, H2), lambda i: (0, 0)),
            pl.BlockSpec((1, H2), lambda i: (0, 0)),
            pl.BlockSpec((1, H2), lambda i: (0, 0)),
            # b3 is a single scalar -> SMEM, no VMEM tile / double-buffering.
            pl.BlockSpec(memory_space=pltpu.MemorySpace.SMEM),
        ],
        # Lane-dense (1, TILE_B) output row -> unmasked full-lane stores.
        out_specs=pl.BlockSpec((1, tile_b), lambda i: (0, i)),
        compiler_params=pltpu.CompilerParams(
            dimension_semantics=("parallel",)),
    )(
        x,
        w1, params["b1"],
        w2, params["b2"],
        w3, params["b3"],
    )
    # (1, B_pad) lane-dense row -> (B, 1) column, dropping batch padding.
    return out[0, :B][:, None]


def init_params(key, input_dim, hidden_dim=64):
    """Deterministic init mimicking nn.Linear (uniform(-1/sqrt(fan_in), +))."""
    h2 = hidden_dim // 2
    ks = jax.random.split(key, 6)

    def linear(kw, kb, fan_in, fan_out):
        bound = 1.0 / jnp.sqrt(jnp.float32(fan_in))
        w = jax.random.uniform(kw, (fan_in, fan_out), jnp.float32, -bound, bound)
        b = jax.random.uniform(kb, (1, fan_out), jnp.float32, -bound, bound)
        return w, b

    w1, b1 = linear(ks[0], ks[1], input_dim, hidden_dim)       # (D_in, H)
    w2, b2 = linear(ks[2], ks[3], hidden_dim, h2)              # (H, H2)
    w3t, b3 = linear(ks[4], ks[5], h2, 1)                      # (H2, 1)
    w3 = w3t.T                                                 # store as (1, H2) row
    return dict(w1=w1, b1=b1, w2=w2, b2=b2, w3=w3, b3=b3)


if __name__ == "__main__":
    key = jax.random.PRNGKey(0)
    k_param, k_x = jax.random.split(key)

    batch, seq, input_dim, hidden_dim = 2, 8, 16, 32
    params = init_params(k_param, input_dim, hidden_dim)

    # 3-D input exercises the x[:, -1, :] branch.
    x = jax.random.normal(k_x, (batch, seq, input_dim), jnp.float32)

    out = simple_model_forward(x, params)
    jax.block_until_ready(out)

    # Plain-JAX reference.
    xs = x[:, -1, :]
    h1 = jnp.maximum(xs @ params["w1"] + params["b1"], 0.0)
    h2 = jnp.maximum(h1 @ params["w2"] + params["b2"], 0.0)
    ref = h2 @ params["w3"].T + params["b3"]

    assert out.shape == (batch, 1)
    assert jnp.allclose(out, ref, atol=1e-5, rtol=1e-5)

    # 2-D input path (no seq dimension) goes through the same kernel.
    out2d = simple_model_forward(xs, params)
    jax.block_until_ready(out2d)
    assert out2d.shape == (batch, 1)
    assert jnp.allclose(out2d, ref, atol=1e-5, rtol=1e-5)

    # Larger batch exercises the multi-tile "parallel" grid and the ragged
    # (padded) final tile.
    big_b = 1000
    xb = jax.random.normal(jax.random.PRNGKey(1), (big_b, input_dim), jnp.float32)
    outb = simple_model_forward(xb, params)
    jax.block_until_ready(outb)
    h1b = jnp.maximum(xb @ params["w1"] + params["b1"], 0.0)
    h2b = jnp.maximum(h1b @ params["w2"] + params["b2"], 0.0)
    refb = h2b @ params["w3"].T + params["b3"]
    assert outb.shape == (big_b, 1)
    assert jnp.allclose(outb, refb, atol=1e-5, rtol=1e-5)

    print("KERNEL_OK")
</pallas_src>

<mosaic_0001>
module attributes {stable_mosaic.version = 11 : i64} {
  func.func @_mlp_kernel(%arg0: i32, %arg1: memref<128x16xf32, #tpu.memory_space<vmem>>, %arg2: memref<16x32xf32, #tpu.memory_space<vmem>>, %arg3: memref<1x32xf32, #tpu.memory_space<vmem>>, %arg4: memref<32x16xf32, #tpu.memory_space<vmem>>, %arg5: memref<1x16xf32, #tpu.memory_space<vmem>>, %arg6: memref<1x16xf32, #tpu.memory_space<vmem>>, %arg7: memref<1x1xf32, #tpu.memory_space<smem>>, %arg8: memref<1x128xf32, #tpu.memory_space<vmem>>) attributes {dimension_semantics = [#tpu.dimension_semantics<parallel>], iteration_bounds = array<i64: 1>, scalar_prefetch = 0 : i64, scratch_operands = 0 : i64, tpu.core_type = #tpu.core_type<tc>, window_params = [{transform_indices = @transform_0, window_bounds = array<i64: 128, 16>}, {pipeline_mode = #tpu.pipeline_mode<synchronous>, transform_indices = @transform_1, window_bounds = array<i64: 16, 32>}, {pipeline_mode = #tpu.pipeline_mode<synchronous>, transform_indices = @transform_2, window_bounds = array<i64: 1, 32>}, {pipeline_mode = #tpu.pipeline_mode<synchronous>, transform_indices = @transform_3, window_bounds = array<i64: 32, 16>}, {pipeline_mode = #tpu.pipeline_mode<synchronous>, transform_indices = @transform_4, window_bounds = array<i64: 1, 16>}, {pipeline_mode = #tpu.pipeline_mode<synchronous>, transform_indices = @transform_5, window_bounds = array<i64: 1, 16>}, {transform_indices = @transform_6, window_bounds = array<i64: 1, 1>}, {transform_indices = @transform_7, window_bounds = array<i64: 1, 128>}]} {
    %c0 = arith.constant 0 : index
    %c0_0 = arith.constant 0 : index
    %0 = vector.load %arg1[%c0, %c0_0] : memref<128x16xf32, #tpu.memory_space<vmem>>, vector<128x16xf32>
    %c0_1 = arith.constant 0 : index
    %c0_2 = arith.constant 0 : index
    %1 = vector.load %arg2[%c0_1, %c0_2] : memref<16x32xf32, #tpu.memory_space<vmem>>, vector<16x32xf32>
    %cst = arith.constant dense<0.000000e+00> : vector<128x32xf32>
    %2 = tpu.matmul %0, %1, %cst {dimension_numbers = #tpu.dot_dimension_numbers<[1], [0], [0], [1], [0, 0, 1, 1], [], []>} : vector<128x16xf32>, vector<16x32xf32>, vector<128x32xf32> -> vector<128x32xf32>
    %c0_3 = arith.constant 0 : index
    %c0_4 = arith.constant 0 : index
    %3 = vector.load %arg3[%c0_3, %c0_4] : memref<1x32xf32, #tpu.memory_space<vmem>>, vector<1x32xf32>
    %4 = vector.broadcast %3 : vector<1x32xf32> to vector<128x32xf32>
    %5 = arith.addf %2, %4 : vector<128x32xf32>
    %cst_5 = arith.constant 0.000000e+00 : f32
    %6 = vector.broadcast %cst_5 : f32 to vector<128x32xf32>
    %7 = arith.maximumf %5, %6 : vector<128x32xf32>
    %c0_6 = arith.constant 0 : index
    %c0_7 = arith.constant 0 : index
    %8 = vector.load %arg4[%c0_6, %c0_7] : memref<32x16xf32, #tpu.memory_space<vmem>>, vector<32x16xf32>
    %cst_8 = arith.constant dense<0.000000e+00> : vector<128x16xf32>
    %9 = tpu.matmul %7, %8, %cst_8 {dimension_numbers = #tpu.dot_dimension_numbers<[1], [0], [0], [1], [0, 0, 1, 1], [], []>} : vector<128x32xf32>, vector<32x16xf32>, vector<128x16xf32> -> vector<128x16xf32>
    %c0_9 = arith.constant 0 : index
    %c0_10 = arith.constant 0 : index
    %10 = vector.load %arg5[%c0_9, %c0_10] : memref<1x16xf32, #tpu.memory_space<vmem>>, vector<1x16xf32>
    %11 = vector.broadcast %10 : vector<1x16xf32> to vector<128x16xf32>
    %12 = arith.addf %9, %11 : vector<128x16xf32>
    %cst_11 = arith.constant 0.000000e+00 : f32
    %13 = vector.broadcast %cst_11 : f32 to vector<128x16xf32>
    %14 = arith.maximumf %12, %13 : vector<128x16xf32>
    %c0_12 = arith.constant 0 : index
    %c0_13 = arith.constant 0 : index
    %15 = vector.load %arg6[%c0_12, %c0_13] : memref<1x16xf32, #tpu.memory_space<vmem>>, vector<1x16xf32>
    %cst_14 = arith.constant dense<0.000000e+00> : vector<1x128xf32>
    %16 = tpu.matmul %15, %14, %cst_14 {dimension_numbers = #tpu.dot_dimension_numbers<[1], [1], [0], [0], [0, 0, 1, 0], [], []>} : vector<1x16xf32>, vector<128x16xf32>, vector<1x128xf32> -> vector<1x128xf32>
    %c0_15 = arith.constant 0 : index
    %c0_16 = arith.constant 0 : index
    %17 = memref.load %arg7[%c0_15, %c0_16] : memref<1x1xf32, #tpu.memory_space<smem>>
    %18 = vector.broadcast %17 : f32 to vector<1x128xf32>
    %19 = arith.addf %16, %18 : vector<1x128xf32>
    %c0_17 = arith.constant 0 : index
    %c0_18 = arith.constant 0 : index
    %20 = vector.load %arg8[%c0_17, %c0_18] : memref<1x128xf32, #tpu.memory_space<vmem>>, vector<1x128xf32>
    tpu.vector_store %arg8[%c0_17, %c0_18], %19 {strides = array<i32>} : memref<1x128xf32, #tpu.memory_space<vmem>>, vector<1x128xf32>,
    return
  }
  func.func @transform_0(%arg0: i32) -> (i32, i32) {
    %c0_i32 = arith.constant 0 : i32
    %c0_i32_0 = arith.constant 0 : i32
    return %arg0, %c0_i32 : i32, i32
  }
  func.func @transform_1(%arg0: i32) -> (i32, i32) {
    %c0_i32 = arith.constant 0 : i32
    %c0_i32_0 = arith.constant 0 : i32
    %c0_i32_1 = arith.constant 0 : i32
    return %c0_i32, %c0_i32_0 : i32, i32
  }
  func.func @transform_2(%arg0: i32) -> (i32, i32) {
    %c0_i32 = arith.constant 0 : i32
    %c0_i32_0 = arith.constant 0 : i32
    %c0_i32_1 = arith.constant 0 : i32
    return %c0_i32, %c0_i32_0 : i32, i32
  }
  func.func @transform_3(%arg0: i32) -> (i32, i32) {
    %c0_i32 = arith.constant 0 : i32
    %c0_i32_0 = arith.constant 0 : i32
    %c0_i32_1 = arith.constant 0 : i32
    return %c0_i32, %c0_i32_0 : i32, i32
  }
  func.func @transform_4(%arg0: i32) -> (i32, i32) {
    %c0_i32 = arith.constant 0 : i32
    %c0_i32_0 = arith.constant 0 : i32
    %c0_i32_1 = arith.constant 0 : i32
    return %c0_i32, %c0_i32_0 : i32, i32
  }
  func.func @transform_5(%arg0: i32) -> (i32, i32) {
    %c0_i32 = arith.constant 0 : i32
    %c0_i32_0 = arith.constant 0 : i32
    %c0_i32_1 = arith.constant 0 : i32
    return %c0_i32, %c0_i32_0 : i32, i32
  }
  func.func @transform_6(%arg0: i32) -> (i32, i32) {
    %c0_i32 = arith.constant 0 : i32
    %c0_i32_0 = arith.constant 0 : i32
    %c0_i32_1 = arith.constant 0 : i32
    return %c0_i32, %c0_i32_0 : i32, i32
  }
  func.func @transform_7(%arg0: i32) -> (i32, i32) {
    %c0_i32 = arith.constant 0 : i32
    %c0_i32_0 = arith.constant 0 : i32
    return %c0_i32, %arg0 : i32, i32
  }
}

</mosaic_0001>

<llo_original>
// kernel: simple_model_forward.1
$region0: #{simple_model_forward.1}
  #allocation0 [shape = 'u32[]', space=smem, size = 0x4, offset = 0x4, fixed_abs, tag = 'smem constant byte address 0x4 - core index']
  #allocation1 [shape = 'u32[72,128]{1,0:T(1,128)}', space=vmem, size = 0x9000, scoped, tag = 'internal scratch']
  #allocation2 [shape = 'f32[1,1]{1,0:T(1,128)S(6)}', space=smem, size = 0x200, scoped, tag = 'scoped memory for simple_model_forward.1']
  %s0 = inlined_call_operand.vmem [shape: f32[128,16], index: 0, kind: input, shape index: {}]
  %s1 = inlined_call_operand.vmem [shape: f32[16,32], index: 1, kind: input, shape index: {}]
  %s2 = inlined_call_operand.vmem [shape: f32[1,32], index: 2, kind: input, shape index: {}]
  %s3 = inlined_call_operand.vmem [shape: f32[32,16], index: 3, kind: input, shape index: {}]
  %s4 = inlined_call_operand.vmem [shape: f32[1,16], index: 4, kind: input, shape index: {}]
  %s5 = inlined_call_operand.vmem [shape: f32[1,16], index: 5, kind: input, shape index: {}]
  %s6 = inlined_call_operand.<no memory space> [shape: f32[1,1], index: 6, kind: input, shape index: {}]
  %s7 = inlined_call_operand.vmem [shape: f32[1,128], index: 7, kind: output, shape index: {}]
  %s8 = sld [smem:[#allocation0]]
  $region38: #{simple_model_forward.1} parent=0
    _
  %s10 = ssub.s32 1, %s8
  %s11 = scalar_select 0, %s10, %s8
  %12 = sst [smem:[#allocation2]] %s6
  // Predicated region
  $region2: #{simple_model_forward.1} parent=0 // pred_check
    _
  $region3: #{simple_model_forward.1} parent=0 // pred_check_branch
    %14 = sbr.rel (0) target = $region5
  $region4: #{simple_model_forward.1} parent=0 // pred_region
    _
  $region5: #{simple_model_forward.1} parent=0 // pred_fallthru
    _
  // Predicated region
  $region6: #{simple_model_forward.1} parent=0 // pred_check
    _
  $region7: #{simple_model_forward.1} parent=0 // pred_check_branch
    %16 = sbr.rel (0) target = $region9
  $region8: #{simple_model_forward.1} parent=0 // pred_region
    _
  $region9: #{simple_model_forward.1} parent=0 // pred_fallthru
    _
  // Predicated region
  $region10: #{simple_model_forward.1} parent=0 // pred_check
    _
  $region11: #{simple_model_forward.1} parent=0 // pred_check_branch
    %18 = sbr.rel (0) target = $region13
  $region12: #{simple_model_forward.1} parent=0 // pred_region
    _
  $region13: #{simple_model_forward.1} parent=0 // pred_fallthru
    _
  // Predicated region
  $region14: #{simple_model_forward.1} parent=0 // pred_check
    _
  $region15: #{simple_model_forward.1} parent=0 // pred_check_branch
    %20 = sbr.rel (0) target = $region17
  $region16: #{simple_model_forward.1} parent=0 // pred_region
    _
  $region17: #{simple_model_forward.1} parent=0 // pred_fallthru
    _
  // Predicated region
  $region18: #{simple_model_forward.1} parent=0 // pred_check
    _
  $region19: #{simple_model_forward.1} parent=0 // pred_check_branch
    %22 = sbr.rel (0) target = $region21
  $region20: #{simple_model_forward.1} parent=0 // pred_region
    _
  $region21: #{simple_model_forward.1} parent=0 // pred_fallthru
    _
  // Predicated region
  $region22: #{simple_model_forward.1} parent=0 // pred_check
    _
  $region23: #{simple_model_forward.1} parent=0 // pred_check_branch
    %24 = sbr.rel (0) target = $region25
  $region24: #{simple_model_forward.1} parent=0 // pred_region
    _
  $region25: #{simple_model_forward.1} parent=0 // pred_fallthru
    _
  // Predicated region
  $region26: #{simple_model_forward.1} parent=0 // pred_check
    _
  $region27: #{simple_model_forward.1} parent=0 // pred_check_branch
    %26 = sbr.rel (0) target = $region29
  $region28: #{simple_model_forward.1} parent=0 // pred_region
    _
  $region29: #{simple_model_forward.1} parent=0 // pred_fallthru
    _
  %v27 = vld [vmem:[%s0] sm:$0xff]
  %v28 = vld [vmem:[%s0 + $0x8] sm:$0xff]
  %v29 = vld [vmem:[%s0 + $0x10] sm:$0xff]
  %v30 = vld [vmem:[%s0 + $0x18] sm:$0xff]
  %v31 = vld [vmem:[%s0 + $0x20] sm:$0xff]
  %v32 = vld [vmem:[%s0 + $0x28] sm:$0xff]
  %v33 = vld [vmem:[%s0 + $0x30] sm:$0xff]
  %v34 = vld [vmem:[%s0 + $0x38] sm:$0xff]
  %v35 = vld [vmem:[%s0 + $0x40] sm:$0xff]
  %v36 = vld [vmem:[%s0 + $0x48] sm:$0xff]
  %v37 = vld [vmem:[%s0 + $0x50] sm:$0xff]
  %v38 = vld [vmem:[%s0 + $0x58] sm:$0xff]
  %v39 = vld [vmem:[%s0 + $0x60] sm:$0xff]
  %v40 = vld [vmem:[%s0 + $0x68] sm:$0xff]
  %v41 = vld [vmem:[%s0 + $0x70] sm:$0xff]
  %v42 = vld [vmem:[%s0 + $0x78] sm:$0xff]
  %v43 = vld [vmem:[%s1] sm:$0xff]
  %v44 = vld [vmem:[%s1 + $0x8] sm:$0xff]
  %v45 = vld [vmem:[%s2] sm:$0x1]
  %v47 = vperm.slane %v45, 0
  %vm49 = vcmask 130048
  %v51 = vsel %vm49, %v27, 0
  %v54 = vsel %vm49, %v28, 0
  %v57 = vsel %vm49, %v29, 0
  %v60 = vsel %vm49, %v30, 0
  %v63 = vsel %vm49, %v31, 0
  %v66 = vsel %vm49, %v32, 0
  %v69 = vsel %vm49, %v33, 0
  %v72 = vsel %vm49, %v34, 0
  %v75 = vsel %vm49, %v35, 0
  %v78 = vsel %vm49, %v36, 0
  %v81 = vsel %vm49, %v37, 0
  %v84 = vsel %vm49, %v38, 0
  %v87 = vsel %vm49, %v39, 0
  %v90 = vsel %vm49, %v40, 0
  %v93 = vsel %vm49, %v41, 0
  %v96 = vsel %vm49, %v42, 0
  %98 = vmatpush.msra.mxu0 0.0
  %99 = vmatpush.msra.mxu0 0.0
  %100 = vmatpush.msra.mxu0 0.0
  %101 = vmatpush.msra.mxu0 0.0
  %102 = vmatpush.msra.mxu0 0.0
  %103 = vmatpush.msra.mxu0 0.0
  %104 = vmatpush.msra.mxu0 0.0
  %105 = vmatpush.msra.mxu0 0.0
  %106 = vmatpush.msra.mxu0 0.0
  %107 = vmatpush.msra.mxu0 0.0
  %108 = vmatpush.msra.mxu0 0.0
  %109 = vmatpush.msra.mxu0 0.0
  %110 = vmatpush.msra.mxu0 0.0
  %111 = vmatpush.msra.mxu0 0.0
  %112 = vmatpush.msra.mxu0 %v44
  %113 = vmatpush.msra.mxu0 %v43
  %114 = vmatmul.f32.gmra.mxu0 %v51
  %v115 = vpop.f32.mrf.mxu0
  %v116 = vadd.f32 %v47, %v115
  %117 = vmatmul.f32.gmra.mxu0 %v54
  %v118 = vpop.f32.mrf.mxu0
  %v119 = vadd.f32 %v47, %v118
  %120 = vmatmul.f32.gmra.mxu0 %v57
  %v121 = vpop.f32.mrf.mxu0
  %v122 = vadd.f32 %v47, %v121
  %123 = vmatmul.f32.gmra.mxu0 %v60
  %v124 = vpop.f32.mrf.mxu0
  %v125 = vadd.f32 %v47, %v124
  %126 = vmatmul.f32.gmra.mxu0 %v63
  %v127 = vpop.f32.mrf.mxu0
  %v128 = vadd.f32 %v47, %v127
  %129 = vmatmul.f32.gmra.mxu0 %v66
  %v130 = vpop.f32.mrf.mxu0
  %v131 = vadd.f32 %v47, %v130
  %132 = vmatmul.f32.gmra.mxu0 %v69
  %v133 = vpop.f32.mrf.mxu0
  %v134 = vadd.f32 %v47, %v133
  %135 = vmatmul.f32.gmra.mxu0 %v72
  %v136 = vpop.f32.mrf.mxu0
  %v137 = vadd.f32 %v47, %v136
  %138 = vmatmul.f32.gmra.mxu0 %v75
  %v139 = vpop.f32.mrf.mxu0
  %v140 = vadd.f32 %v47, %v139
  %141 = vmatmul.f32.gmra.mxu0 %v78
  %v142 = vpop.f32.mrf.mxu0
  %v143 = vadd.f32 %v47, %v142
  %144 = vmatmul.f32.gmra.mxu0 %v81
  %v145 = vpop.f32.mrf.mxu0
  %v146 = vadd.f32 %v47, %v145
  %147 = vmatmul.f32.gmra.mxu0 %v84
  %v148 = vpop.f32.mrf.mxu0
  %v149 = vadd.f32 %v47, %v148
  %150 = vmatmul.f32.gmra.mxu0 %v87
  %v151 = vpop.f32.mrf.mxu0
  %v152 = vadd.f32 %v47, %v151
  %153 = vmatmul.f32.gmra.mxu0 %v90
  %v154 = vpop.f32.mrf.mxu0
  %v155 = vadd.f32 %v47, %v154
  %156 = vmatmul.f32.gmra.mxu0 %v93
  %v157 = vpop.f32.mrf.mxu0
  %v158 = vadd.f32 %v47, %v157
  %159 = vmatmul.f32.gmra.mxu0 %v96
  %v160 = vpop.f32.mrf.mxu0
  %v161 = vadd.f32 %v47, %v160
  %162 = vdwg.mxu0
  %v163 = vmax.f32 %v116, 0.0
  %v164 = vmax.f32 %v119, 0.0
  %v165 = vmax.f32 %v122, 0.0
  %v166 = vmax.f32 %v125, 0.0
  %v167 = vmax.f32 %v128, 0.0
  %v168 = vmax.f32 %v131, 0.0
  %v169 = vmax.f32 %v134, 0.0
  %v170 = vmax.f32 %v137, 0.0
  %v171 = vmax.f32 %v140, 0.0
  %v172 = vmax.f32 %v143, 0.0
  %v173 = vmax.f32 %v146, 0.0
  %v174 = vmax.f32 %v149, 0.0
  %v175 = vmax.f32 %v152, 0.0
  %v176 = vmax.f32 %v155, 0.0
  %v177 = vmax.f32 %v158, 0.0
  %v178 = vmax.f32 %v161, 0.0
  %v179 = vld [vmem:[%s3] sm:$0xff]
  %v180 = vld [vmem:[%s3 + $0x8] sm:$0xff]
  %v181 = vld [vmem:[%s3 + $0x10] sm:$0xff]
  %v182 = vld [vmem:[%s3 + $0x18] sm:$0xff]
  %v183 = vld [vmem:[%s4] sm:$0x1]
  %v185 = vperm.slane %v183, 0
  %vm187 = vcmask 261120
  %v189 = vsel %vm187, %v163, 0
  %v192 = vsel %vm187, %v164, 0
  %v195 = vsel %vm187, %v165, 0
  %v198 = vsel %vm187, %v166, 0
  %v201 = vsel %vm187, %v167, 0
  %v204 = vsel %vm187, %v168, 0
  %v207 = vsel %vm187, %v169, 0
  %v210 = vsel %vm187, %v170, 0
  %v213 = vsel %vm187, %v171, 0
  %v216 = vsel %vm187, %v172, 0
  %v219 = vsel %vm187, %v173, 0
  %v222 = vsel %vm187, %v174, 0
  %v225 = vsel %vm187, %v175, 0
  %v228 = vsel %vm187, %v176, 0
  %v231 = vsel %vm187, %v177, 0
  %v234 = vsel %vm187, %v178, 0
  %236 = vmatpush.msra.mxu0 0.0
  %237 = vmatpush.msra.mxu0 0.0
  %238 = vmatpush.msra.mxu0 0.0
  %239 = vmatpush.msra.mxu0 0.0
  %240 = vmatpush.msra.mxu0 0.0
  %241 = vmatpush.msra.mxu0 0.0
  %242 = vmatpush.msra.mxu0 0.0
  %243 = vmatpush.msra.mxu0 0.0
  %244 = vmatpush.msra.mxu0 0.0
  %245 = vmatpush.msra.mxu0 0.0
  %246 = vmatpush.msra.mxu0 0.0
  %247 = vmatpush.msra.mxu0 0.0
  %248 = vmatpush.msra.mxu0 %v182
  %249 = vmatpush.msra.mxu0 %v181
  %250 = vmatpush.msra.mxu0 %v180
  %251 = vmatpush.msra.mxu0 %v179
  %252 = vmatmul.f32.gmra.mxu0 %v189
  %v253 = vpop.f32.mrf.mxu0
  %v254 = vadd.f32 %v185, %v253
  %255 = vmatmul.f32.gmra.mxu0 %v192
  %v256 = vpop.f32.mrf.mxu0
  %v257 = vadd.f32 %v185, %v256
  %258 = vmatmul.f32.gmra.mxu0 %v195
  %v259 = vpop.f32.mrf.mxu0
  %v260 = vadd.f32 %v185, %v259
  %261 = vmatmul.f32.gmra.mxu0 %v198
  %v262 = vpop.f32.mrf.mxu0
  %v263 = vadd.f32 %v185, %v262
  %264 = vmatmul.f32.gmra.mxu0 %v201
  %v265 = vpop.f32.mrf.mxu0
  %v266 = vadd.f32 %v185, %v265
  %267 = vmatmul.f32.gmra.mxu0 %v204
  %v268 = vpop.f32.mrf.mxu0
  %v269 = vadd.f32 %v185, %v268
  %270 = vmatmul.f32.gmra.mxu0 %v207
  %v271 = vpop.f32.mrf.mxu0
  %v272 = vadd.f32 %v185, %v271
  %273 = vmatmul.f32.gmra.mxu0 %v210
  %v274 = vpop.f32.mrf.mxu0
  %v275 = vadd.f32 %v185, %v274
  %276 = vmatmul.f32.gmra.mxu0 %v213
  %v277 = vpop.f32.mrf.mxu0
  %v278 = vadd.f32 %v185, %v277
  %279 = vmatmul.f32.gmra.mxu0 %v216
  %v280 = vpop.f32.mrf.mxu0
  %v281 = vadd.f32 %v185, %v280
  %282 = vmatmul.f32.gmra.mxu0 %v219
  %v283 = vpop.f32.mrf.mxu0
  %v284 = vadd.f32 %v185, %v283
  %285 = vmatmul.f32.gmra.mxu0 %v222
  %v286 = vpop.f32.mrf.mxu0
  %v287 = vadd.f32 %v185, %v286
  %288 = vmatmul.f32.gmra.mxu0 %v225
  %v289 = vpop.f32.mrf.mxu0
  %v290 = vadd.f32 %v185, %v289
  %291 = vmatmul.f32.gmra.mxu0 %v228
  %v292 = vpop.f32.mrf.mxu0
  %v293 = vadd.f32 %v185, %v292
  %294 = vmatmul.f32.gmra.mxu0 %v231
  %v295 = vpop.f32.mrf.mxu0
  %v296 = vadd.f32 %v185, %v295
  %297 = vmatmul.f32.gmra.mxu0 %v234
  %v298 = vpop.f32.mrf.mxu0
  %v299 = vadd.f32 %v185, %v298
  %300 = vdwg.mxu0
  %v301 = vmax.f32 %v254, 0.0
  %v302 = vmax.f32 %v257, 0.0
  %v303 = vmax.f32 %v260, 0.0
  %v304 = vmax.f32 %v263, 0.0
  %v305 = vmax.f32 %v266, 0.0
  %v306 = vmax.f32 %v269, 0.0
  %v307 = vmax.f32 %v272, 0.0
  %v308 = vmax.f32 %v275, 0.0
  %v309 = vmax.f32 %v278, 0.0
  %v310 = vmax.f32 %v281, 0.0
  %v311 = vmax.f32 %v284, 0.0
  %v312 = vmax.f32 %v287, 0.0
  %v313 = vmax.f32 %v290, 0.0
  %v314 = vmax.f32 %v293, 0.0
  %v315 = vmax.f32 %v296, 0.0
  %v316 = vmax.f32 %v299, 0.0
  %v317 = vld [vmem:[%s5] sm:$0x1]
  %s318 = sld [smem:[#allocation2]]
  %v319 = vstv %s318
  %v321 = vsel %vm49, %v317, 0
  %v324 = vsel %vm49, %v301, 0
  %v327 = vsel %vm49, %v302, 0
  %v330 = vsel %vm49, %v303, 0
  %v333 = vsel %vm49, %v304, 0
  %v336 = vsel %vm49, %v305, 0
  %v339 = vsel %vm49, %v306, 0
  %v342 = vsel %vm49, %v307, 0
  %v345 = vsel %vm49, %v308, 0
  %v348 = vsel %vm49, %v309, 0
  %v351 = vsel %vm49, %v310, 0
  %v354 = vsel %vm49, %v311, 0
  %v357 = vsel %vm49, %v312, 0
  %v360 = vsel %vm49, %v313, 0
  %v363 = vsel %vm49, %v314, 0
  %v366 = vsel %vm49, %v315, 0
  %v369 = vsel %vm49, %v316, 0
  %371 = vmatpush.xpose.msra.mxu0 %v369
  %372 = vmatpush.xpose.msra.mxu0 %v366
  %373 = vmatpush.xpose.msra.mxu0 %v363
  %374 = vmatpush.xpose.msra.mxu0 %v360
  %375 = vmatpush.xpose.msra.mxu0 %v357
  %376 = vmatpush.xpose.msra.mxu0 %v354
  %377 = vmatpush.xpose.msra.mxu0 %v351
  %378 = vmatpush.xpose.msra.mxu0 %v348
  %379 = vmatpush.xpose.msra.mxu0 %v345
  %380 = vmatpush.xpose.msra.mxu0 %v342
  %381 = vmatpush.xpose.msra.mxu0 %v339
  %382 = vmatpush.xpose.msra.mxu0 %v336
  %383 = vmatpush.xpose.msra.mxu0 %v333
  %384 = vmatpush.xpose.msra.mxu0 %v330
  %385 = vmatpush.xpose.msra.mxu0 %v327
  %386 = vmatpush.xpose.msra.mxu0 %v324
  %387 = vmatmul.f32.gmra.mxu0 %v321
  %v388 = vpop.f32.mrf.mxu0
  %v389 = vadd.f32 %v319, %v388
  %390 = vdwg.mxu0
  %391 = vst [vmem:[%s7] sm:$0x1] %v389
  // Predicated region
  $region30: #{simple_model_forward.1} parent=0 // pred_check
    _
  $region31: #{simple_model_forward.1} parent=0 // pred_check_branch
    %393 = sbr.rel (0) target = $region33
  $region32: #{simple_model_forward.1} parent=0 // pred_region
    _
  $region33: #{simple_model_forward.1} parent=0 // pred_fallthru
    _
  // Predicated region
  $region34: #{simple_model_forward.1} parent=0 // pred_check
    _
  $region35: #{simple_model_forward.1} parent=0 // pred_check_branch
    %395 = sbr.rel (0) target = $region37
  $region36: #{simple_model_forward.1} parent=0 // pred_region
    _
  $region37: #{simple_model_forward.1} parent=0 // pred_fallthru
    _

</llo_original>
